<compile_context>
chip_gen: v5e
topology: v5e:2x2
jax: 0.10.0
libtpu: 0.0.40
codegen_flags: <defaults>
</compile_context>

<pallas_src>
import functools

import jax
import jax.numpy as jnp
from jax.experimental import pallas as pl
from jax.experimental.pallas import tpu as pltpu

LANE = 128


def _round_up(n, m):
    return ((n + m - 1) // m) * m


def _pad_to(a, shape):
    pads = [(0, s - d) for d, s in zip(a.shape, shape)]
    return jnp.pad(a, pads)


# ----------------------------------------------------------------------------
# Pallas kernel: the whole sequence. One grid step == one module forward().
# ----------------------------------------------------------------------------
def _prnn_seq_kernel(
    x_ref,        # (B, INp)        current timestep input (squeezed T dim)
    hinit_ref,    # (3, B, Hp)      initial hidden states (resident)
    u0_ref,       # (INp, Hp)       input->hidden of ei_cell      (resident)
    u1_ref,       # (Hp, Hp)        input->hidden of ei_cell_1    (resident)
    u2_ref,       # (Hp, Hp)        input->hidden of ei_cell_2    (resident)
    wstk_ref,     # (3, Hp, Hp)     stacked recurrent weights     (resident)
    bstk_ref,     # (3, B, Hp)      stacked, pre-broadcast biases (resident)
    wo_ref,       # (Hp, Op)        fc_output weight              (resident)
    bo_ref,       # (B, Op)         fc_output bias, pre-broadcast (resident)
    y_ref,        # out: (B, Op)    logits for this timestep
    hout_ref,     # out: (B, Hp)    x_rnn (last cell's new hidden) this timestep
    h_scr,        # scratch VMEM: (3, B, Hp) hidden carry across grid steps
):
    f32 = jnp.float32
    t = pl.program_id(0)

    @pl.when(t == 0)
    def _():
        h_scr[...] = hinit_ref[...]

    # --- recurrent path, hoisted off the critical chain ----------------------
    # r[n] = h_prev[n] @ W[n] + b[n]; the three matmuls are independent, so one
    # stacked batched dot lets the MXU pipeline them back-to-back.
    h_prev = h_scr[...]                                       # (3, B, Hp)
    r = jnp.einsum(
        "nbh,nhk->nbk", h_prev, wstk_ref[...],
        preferred_element_type=f32,
    ) + bstk_ref[...]

    # --- serial input-path chain (inherent data dependence) ------------------
    x = x_ref[...]
    h0n = jnp.maximum(
        jnp.dot(x, u0_ref[...], preferred_element_type=f32) + r[0], 0.0)
    h1n = jnp.maximum(
        jnp.dot(h0n, u1_ref[...], preferred_element_type=f32) + r[1], 0.0)
    h2n = jnp.maximum(
        jnp.dot(h1n, u2_ref[...], preferred_element_type=f32) + r[2], 0.0)

    # --- fc_output (EiDenseLayerHomeostatic, nonlinearity=None) --------------
    y = jnp.dot(h2n, wo_ref[...], preferred_element_type=f32) + bo_ref[...]

    # carry hidden states to the next grid iteration
    h_scr[0] = h0n
    h_scr[1] = h1n
    h_scr[2] = h2n

    y_ref[...] = y.astype(y_ref.dtype)
    hout_ref[...] = h2n.astype(hout_ref.dtype)


# ----------------------------------------------------------------------------
# Wrappers
# ----------------------------------------------------------------------------
def prnn_forward_seq(x_seq, hiddens, params):
    """Run T sequential module-forwards in one kernel.

    x_seq:   (T, B, IN)
    hiddens: tuple of three (B, H) previous hidden states
    params:  ((u0,w0,b0),(u1,w1,b1),(u2,w2,b2),(wo,bo)) with weights already
             transposed to (in, out) layout.
    Returns (ys, x_rnns) with shapes (T, B, O) and (T, B, H): the per-timestep
    logits and last-cell hidden states (what the module returns each call).
    """
    h0, h1, h2 = hiddens
    (u0, w0, b0), (u1, w1, b1), (u2, w2, b2), (wo, bo) = params

    T, B, IN = x_seq.shape
    H = h0.shape[1]
    O = wo.shape[1]

    INp = _round_up(IN, LANE)
    Hp = _round_up(H, LANE)
    Op = _round_up(O, LANE)

    f32 = jnp.float32

    # Zero-pad to lane-dense shapes (padding is mathematically inert: padded
    # inputs/weights are zero, relu(0)=0, padded output cols are sliced off).
    x_p = _pad_to(x_seq.astype(f32), (T, B, INp))
    hinit = jnp.stack([_pad_to(h.astype(f32), (B, Hp)) for h in (h0, h1, h2)])
    u0p = _pad_to(u0.astype(f32), (INp, Hp))
    u1p = _pad_to(u1.astype(f32), (Hp, Hp))
    u2p = _pad_to(u2.astype(f32), (Hp, Hp))
    wstk = jnp.stack([_pad_to(w.astype(f32), (Hp, Hp)) for w in (w0, w1, w2)])
    bstk = jnp.stack(
        [jnp.broadcast_to(_pad_to(b.astype(f32), (1, Hp)), (B, Hp))
         for b in (b0, b1, b2)])
    wop = _pad_to(wo.astype(f32), (Hp, Op))
    bop = jnp.broadcast_to(_pad_to(bo.astype(f32), (1, Op)), (B, Op))

    grid_spec = pltpu.PrefetchScalarGridSpec(
        num_scalar_prefetch=0,
        grid=(T,),
        in_specs=[
            pl.BlockSpec((None, B, INp), lambda t: (t, 0, 0)),   # x (per step)
            pl.BlockSpec((3, B, Hp), lambda t: (0, 0, 0)),       # hinit
            pl.BlockSpec((INp, Hp), lambda t: (0, 0)),           # u0
            pl.BlockSpec((Hp, Hp), lambda t: (0, 0)),            # u1
            pl.BlockSpec((Hp, Hp), lambda t: (0, 0)),            # u2
            pl.BlockSpec((3, Hp, Hp), lambda t: (0, 0, 0)),      # wstk
            pl.BlockSpec((3, B, Hp), lambda t: (0, 0, 0)),       # bstk
            pl.BlockSpec((Hp, Op), lambda t: (0, 0)),            # wo
            pl.BlockSpec((B, Op), lambda t: (0, 0)),             # bo
        ],
        out_specs=(
            pl.BlockSpec((None, B, Op), lambda t: (t, 0, 0)),    # y per step
            pl.BlockSpec((None, B, Hp), lambda t: (t, 0, 0)),    # x_rnn per step
        ),
        scratch_shapes=[pltpu.VMEM((3, B, Hp), f32)],
    )

    ys_p, houts_p = pl.pallas_call(
        _prnn_seq_kernel,
        out_shape=(
            jax.ShapeDtypeStruct((T, B, Op), f32),
            jax.ShapeDtypeStruct((T, B, Hp), f32),
        ),
        grid_spec=grid_spec,
        compiler_params=pltpu.CompilerParams(
            dimension_semantics=("arbitrary",)),
    )(x_p, hinit, u0p, u1p, u2p, wstk, bstk, wop, bop)

    return ys_p[:, :, :O], houts_p[:, :, :H]


def prnn_forward(x, hiddens, params):
    """Single-timestep forward matching the PyTorch module: returns (y, x_rnn)."""
    ys, houts = prnn_forward_seq(x[None], hiddens, params)
    return ys[0], houts[0]


# ----------------------------------------------------------------------------
# Deterministic parameter construction (E/I weights are positive; effective
# signed weight is Wex - Wei @ Wix). All glue stays in plain JAX.
# ----------------------------------------------------------------------------
def _ei_effective_weight(key, n_out, n_in, ni):
    """Effective signed weight (n_out, n_in) from positive E/I sub-weights."""
    k1, k2, k3 = jax.random.split(key, 3)
    scale = 1.0 / jnp.sqrt(jnp.float32(n_in))
    wex = jnp.abs(jax.random.normal(k1, (n_out, n_in), jnp.float32)) * scale
    wix = jnp.abs(jax.random.normal(k2, (ni, n_in), jnp.float32)) * scale
    wei = jnp.abs(jax.random.normal(k3, (n_out, ni), jnp.float32)) / jnp.float32(ni)
    return wex - wei @ wix


def make_params(key, input_size, hidden_size, output_size):
    ni_i2h = max(1, int(0.1 * hidden_size))
    ni_h2h = max(1, int(0.1 * hidden_size))
    ni_out = max(1, int(0.1 * output_size))

    keys = jax.random.split(key, 8)
    params = []

    # ei_cell: input->hidden uses true input_size (28); hidden->hidden square
    cell_in_sizes = [input_size, hidden_size, hidden_size]
    for i, n_in in enumerate(cell_in_sizes):
        ku, kw = keys[2 * i], keys[2 * i + 1]
        U = _ei_effective_weight(ku, hidden_size, n_in, ni_i2h)        # (H, n_in)
        W = _ei_effective_weight(kw, hidden_size, hidden_size, ni_h2h)  # (H, H)
        b = jnp.zeros((1, hidden_size), jnp.float32)
        # pre-transpose to (in, out) for the kernel's x @ W layout
        params.append((U.T, W.T, b))

    # fc_output: EiDenseLayerHomeostatic(hidden, output), nonlinearity=None
    Wo = _ei_effective_weight(keys[6], output_size, hidden_size, ni_out)  # (O, H)
    bo = jnp.zeros((1, output_size), jnp.float32)
    params.append((Wo.T, bo))
    return tuple(params)


def reference_forward_seq(x_seq, hiddens, params):
    """Pure-JAX reference: call the module forward once per timestep."""
    h0, h1, h2 = hiddens
    (u0, w0, b0), (u1, w1, b1), (u2, w2, b2), (wo, bo) = params
    ys, houts = [], []
    for t in range(x_seq.shape[0]):
        x = x_seq[t]
        h0 = jnp.maximum(x @ u0 + h0 @ w0 + b0, 0.0)
        h1 = jnp.maximum(h0 @ u1 + h1 @ w1 + b1, 0.0)
        h2 = jnp.maximum(h1 @ u2 + h2 @ w2 + b2, 0.0)
        ys.append(h2 @ wo + bo)
        houts.append(h2)
    return jnp.stack(ys), jnp.stack(houts)


if __name__ == "__main__":
    # Shapes consistent with the module: input=28 (MNIST row), hidden=32,
    # output=10 classes, batch=8, sequence of 8 timesteps.
    INPUT, HIDDEN, OUTPUT, BATCH, SEQ = 28, 32, 10, 8, 8

    key = jax.random.PRNGKey(0)
    k_x, k_h, k_p = jax.random.split(key, 3)

    x_seq = jax.random.normal(k_x, (SEQ, BATCH, INPUT), jnp.float32)
    # Nonzero hidden states so the recurrent matmul path is exercised.
    kh0, kh1, kh2 = jax.random.split(k_h, 3)
    hiddens = (
        jax.random.normal(kh0, (BATCH, HIDDEN), jnp.float32),
        jax.random.normal(kh1, (BATCH, HIDDEN), jnp.float32),
        jax.random.normal(kh2, (BATCH, HIDDEN), jnp.float32),
    )
    params = make_params(k_p, INPUT, HIDDEN, OUTPUT)

    # Full-sequence kernel
    ys, x_rnns = jax.jit(prnn_forward_seq)(x_seq, hiddens, params)
    jax.block_until_ready((ys, x_rnns))

    ys_ref, x_rnns_ref = reference_forward_seq(x_seq, hiddens, params)
    assert ys.shape == (SEQ, BATCH, OUTPUT) and x_rnns.shape == (SEQ, BATCH, HIDDEN)
    assert jnp.allclose(ys, ys_ref, atol=1e-3, rtol=1e-3)
    assert jnp.allclose(x_rnns, x_rnns_ref, atol=1e-3, rtol=1e-3)

    # Single-step wrapper (module-signature forward), zero hiddens like reset_hidden()
    zero_h = tuple(jnp.zeros((BATCH, HIDDEN), jnp.float32) for _ in range(3))
    y1, h1 = jax.jit(prnn_forward)(x_seq[0], zero_h, params)
    jax.block_until_ready((y1, h1))
    y1_ref, h1_ref = reference_forward_seq(x_seq[:1], zero_h, params)
    assert jnp.allclose(y1, y1_ref[0], atol=1e-3, rtol=1e-3)
    assert jnp.allclose(h1, h1_ref[0], atol=1e-3, rtol=1e-3)

    print("KERNEL_OK")
</pallas_src>

<mosaic_0001>
module attributes {stable_mosaic.version = 11 : i64} {
  func.func @_prnn_seq_kernel(%arg0: i32, %arg1: memref<1x8x128xf32, #tpu.memory_space<vmem>>, %arg2: memref<3x8x128xf32, #tpu.memory_space<vmem>>, %arg3: memref<128x128xf32, #tpu.memory_space<vmem>>, %arg4: memref<128x128xf32, #tpu.memory_space<vmem>>, %arg5: memref<128x128xf32, #tpu.memory_space<vmem>>, %arg6: memref<3x128x128xf32, #tpu.memory_space<vmem>>, %arg7: memref<3x8x128xf32, #tpu.memory_space<vmem>>, %arg8: memref<128x128xf32, #tpu.memory_space<vmem>>, %arg9: memref<8x128xf32, #tpu.memory_space<vmem>>, %arg10: memref<1x8x128xf32, #tpu.memory_space<vmem>>, %arg11: memref<1x8x128xf32, #tpu.memory_space<vmem>>, %arg12: memref<3x8x128xf32, #tpu.memory_space<vmem>>) attributes {dimension_semantics = [#tpu.dimension_semantics<arbitrary>], iteration_bounds = array<i64: 8>, scalar_prefetch = 0 : i64, scratch_operands = 1 : i64, tpu.core_type = #tpu.core_type<tc>, window_params = [{transform_indices = @transform_0, window_bounds = array<i64: 1, 8, 128>}, {pipeline_mode = #tpu.pipeline_mode<synchronous>, transform_indices = @transform_1, window_bounds = array<i64: 3, 8, 128>}, {pipeline_mode = #tpu.pipeline_mode<synchronous>, transform_indices = @transform_2, window_bounds = array<i64: 128, 128>}, {pipeline_mode = #tpu.pipeline_mode<synchronous>, transform_indices = @transform_3, window_bounds = array<i64: 128, 128>}, {pipeline_mode = #tpu.pipeline_mode<synchronous>, transform_indices = @transform_4, window_bounds = array<i64: 128, 128>}, {pipeline_mode = #tpu.pipeline_mode<synchronous>, transform_indices = @transform_5, window_bounds = array<i64: 3, 128, 128>}, {pipeline_mode = #tpu.pipeline_mode<synchronous>, transform_indices = @transform_6, window_bounds = array<i64: 3, 8, 128>}, {pipeline_mode = #tpu.pipeline_mode<synchronous>, transform_indices = @transform_7, window_bounds = array<i64: 128, 128>}, {pipeline_mode = #tpu.pipeline_mode<synchronous>, transform_indices = @transform_8, window_bounds = array<i64: 8, 128>}, {transform_indices = @transform_9, window_bounds = array<i64: 1, 8, 128>}, {transform_indices = @transform_10, window_bounds = array<i64: 1, 8, 128>}]} {
    %c0_i32 = arith.constant 0 : i32
    %0 = arith.cmpi eq, %arg0, %c0_i32 : i32
    %1 = arith.extui %0 : i1 to i32
    %c0_i32_0 = arith.constant 0 : i32
    %2 = arith.cmpi ne, %1, %c0_i32_0 : i32
    scf.if %2 {
      %c0_42 = arith.constant 0 : index
      %c0_43 = arith.constant 0 : index
      %c0_44 = arith.constant 0 : index
      %50 = vector.load %arg2[%c0_42, %c0_43, %c0_44] : memref<3x8x128xf32, #tpu.memory_space<vmem>>, vector<3x8x128xf32>
      %c0_45 = arith.constant 0 : index
      %c0_46 = arith.constant 0 : index
      %c0_47 = arith.constant 0 : index
      %51 = vector.load %arg12[%c0_45, %c0_46, %c0_47] : memref<3x8x128xf32, #tpu.memory_space<vmem>>, vector<3x8x128xf32>
      tpu.vector_store %arg12[%c0_45, %c0_46, %c0_47], %50 {strides = array<i32>} : memref<3x8x128xf32, #tpu.memory_space<vmem>>, vector<3x8x128xf32>,
    } else {
    }
    %c0 = arith.constant 0 : index
    %c0_1 = arith.constant 0 : index
    %c0_2 = arith.constant 0 : index
    %3 = vector.load %arg12[%c0, %c0_1, %c0_2] : memref<3x8x128xf32, #tpu.memory_space<vmem>>, vector<3x8x128xf32>
    %c0_3 = arith.constant 0 : index
    %c0_4 = arith.constant 0 : index
    %c0_5 = arith.constant 0 : index
    %4 = vector.load %arg6[%c0_3, %c0_4, %c0_5] : memref<3x128x128xf32, #tpu.memory_space<vmem>>, vector<3x128x128xf32>
    "tpu.trace_start"() <{level = 10 : i32, message = "nbh,nhk->nbk"}> : () -> ()
    %cst = arith.constant dense<0.000000e+00> : vector<3x8x128xf32>
    %5 = tpu.matmul %3, %4, %cst {dimension_numbers = #tpu.dot_dimension_numbers<[2], [1], [1], [2], [0, 0, 0, 1, 1, 2], [0], [0]>} : vector<3x8x128xf32>, vector<3x128x128xf32>, vector<3x8x128xf32> -> vector<3x8x128xf32>
    "tpu.trace_stop"() : () -> ()
    %c0_6 = arith.constant 0 : index
    %c0_7 = arith.constant 0 : index
    %c0_8 = arith.constant 0 : index
    %6 = vector.load %arg7[%c0_6, %c0_7, %c0_8] : memref<3x8x128xf32, #tpu.memory_space<vmem>>, vector<3x8x128xf32>
    %7 = arith.addf %5, %6 : vector<3x8x128xf32>
    %c0_9 = arith.constant 0 : index
    %c0_10 = arith.constant 0 : index
    %c0_11 = arith.constant 0 : index
    %8 = vector.load %arg1[%c0_9, %c0_10, %c0_11] : memref<1x8x128xf32, #tpu.memory_space<vmem>>, vector<1x8x128xf32>
    %9 = vector.shape_cast %8 : vector<1x8x128xf32> to vector<8x128xf32>
    %c0_12 = arith.constant 0 : index
    %c0_13 = arith.constant 0 : index
    %10 = vector.load %arg3[%c0_12, %c0_13] : memref<128x128xf32, #tpu.memory_space<vmem>>, vector<128x128xf32>
    %cst_14 = arith.constant dense<0.000000e+00> : vector<8x128xf32>
    %11 = tpu.matmul %9, %10, %cst_14 {dimension_numbers = #tpu.dot_dimension_numbers<[1], [0], [0], [1], [0, 0, 1, 1], [], []>} : vector<8x128xf32>, vector<128x128xf32>, vector<8x128xf32> -> vector<8x128xf32>
    %12 = vector.extract_strided_slice %7 {offsets = [0, 0, 0], sizes = [1, 8, 128], strides = [1, 1, 1]} : vector<3x8x128xf32> to vector<1x8x128xf32>
    %13 = vector.shape_cast %12 : vector<1x8x128xf32> to vector<8x128xf32>
    %14 = arith.addf %11, %13 : vector<8x128xf32>
    %cst_15 = arith.constant 0.000000e+00 : f32
    %15 = vector.broadcast %cst_15 : f32 to vector<8x128xf32>
    %16 = arith.maximumf %14, %15 : vector<8x128xf32>
    %c0_16 = arith.constant 0 : index
    %c0_17 = arith.constant 0 : index
    %17 = vector.load %arg4[%c0_16, %c0_17] : memref<128x128xf32, #tpu.memory_space<vmem>>, vector<128x128xf32>
    %cst_18 = arith.constant dense<0.000000e+00> : vector<8x128xf32>
    %18 = tpu.matmul %16, %17, %cst_18 {dimension_numbers = #tpu.dot_dimension_numbers<[1], [0], [0], [1], [0, 0, 1, 1], [], []>} : vector<8x128xf32>, vector<128x128xf32>, vector<8x128xf32> -> vector<8x128xf32>
    %19 = vector.extract_strided_slice %7 {offsets = [1, 0, 0], sizes = [1, 8, 128], strides = [1, 1, 1]} : vector<3x8x128xf32> to vector<1x8x128xf32>
    %20 = vector.shape_cast %19 : vector<1x8x128xf32> to vector<8x128xf32>
    %21 = arith.addf %18, %20 : vector<8x128xf32>
    %cst_19 = arith.constant 0.000000e+00 : f32
    %22 = vector.broadcast %cst_19 : f32 to vector<8x128xf32>
    %23 = arith.maximumf %21, %22 : vector<8x128xf32>
    %c0_20 = arith.constant 0 : index
    %c0_21 = arith.constant 0 : index
    %24 = vector.load %arg5[%c0_20, %c0_21] : memref<128x128xf32, #tpu.memory_space<vmem>>, vector<128x128xf32>
    %cst_22 = arith.constant dense<0.000000e+00> : vector<8x128xf32>
    %25 = tpu.matmul %23, %24, %cst_22 {dimension_numbers = #tpu.dot_dimension_numbers<[1], [0], [0], [1], [0, 0, 1, 1], [], []>} : vector<8x128xf32>, vector<128x128xf32>, vector<8x128xf32> -> vector<8x128xf32>
    %26 = vector.extract_strided_slice %7 {offsets = [2, 0, 0], sizes = [1, 8, 128], strides = [1, 1, 1]} : vector<3x8x128xf32> to vector<1x8x128xf32>
    %27 = vector.shape_cast %26 : vector<1x8x128xf32> to vector<8x128xf32>
    %28 = arith.addf %25, %27 : vector<8x128xf32>
    %cst_23 = arith.constant 0.000000e+00 : f32
    %29 = vector.broadcast %cst_23 : f32 to vector<8x128xf32>
    %30 = arith.maximumf %28, %29 : vector<8x128xf32>
    %c0_24 = arith.constant 0 : index
    %c0_25 = arith.constant 0 : index
    %31 = vector.load %arg8[%c0_24, %c0_25] : memref<128x128xf32, #tpu.memory_space<vmem>>, vector<128x128xf32>
    %cst_26 = arith.constant dense<0.000000e+00> : vector<8x128xf32>
    %32 = tpu.matmul %30, %31, %cst_26 {dimension_numbers = #tpu.dot_dimension_numbers<[1], [0], [0], [1], [0, 0, 1, 1], [], []>} : vector<8x128xf32>, vector<128x128xf32>, vector<8x128xf32> -> vector<8x128xf32>
    %c0_27 = arith.constant 0 : index
    %c0_28 = arith.constant 0 : index
    %33 = vector.load %arg9[%c0_27, %c0_28] : memref<8x128xf32, #tpu.memory_space<vmem>>, vector<8x128xf32>
    %34 = arith.addf %32, %33 : vector<8x128xf32>
    %c0_29 = arith.constant 0 : index
    %c0_30 = arith.constant 0 : index
    %c0_31 = arith.constant 0 : index
    %35 = vector.load %arg12[%c0_29, %c0_30, %c0_31] : memref<3x8x128xf32, #tpu.memory_space<vmem>>, vector<1x8x128xf32>
    %36 = vector.shape_cast %35 : vector<1x8x128xf32> to vector<8x128xf32>
    %37 = vector.shape_cast %16 : vector<8x128xf32> to vector<1x8x128xf32>
    tpu.vector_store %arg12[%c0_29, %c0_30, %c0_31], %37 {strides = array<i32>} : memref<3x8x128xf32, #tpu.memory_space<vmem>>, vector<1x8x128xf32>,
    %c1 = arith.constant 1 : index
    %c0_32 = arith.constant 0 : index
    %c0_33 = arith.constant 0 : index
    %38 = vector.load %arg12[%c1, %c0_32, %c0_33] : memref<3x8x128xf32, #tpu.memory_space<vmem>>, vector<1x8x128xf32>
    %39 = vector.shape_cast %38 : vector<1x8x128xf32> to vector<8x128xf32>
    %40 = vector.shape_cast %23 : vector<8x128xf32> to vector<1x8x128xf32>
    tpu.vector_store %arg12[%c1, %c0_32, %c0_33], %40 {strides = array<i32>} : memref<3x8x128xf32, #tpu.memory_space<vmem>>, vector<1x8x128xf32>,
    %c2 = arith.constant 2 : index
    %c0_34 = arith.constant 0 : index
    %c0_35 = arith.constant 0 : index
    %41 = vector.load %arg12[%c2, %c0_34, %c0_35] : memref<3x8x128xf32, #tpu.memory_space<vmem>>, vector<1x8x128xf32>
    %42 = vector.shape_cast %41 : vector<1x8x128xf32> to vector<8x128xf32>
    %43 = vector.shape_cast %30 : vector<8x128xf32> to vector<1x8x128xf32>
    tpu.vector_store %arg12[%c2, %c0_34, %c0_35], %43 {strides = array<i32>} : memref<3x8x128xf32, #tpu.memory_space<vmem>>, vector<1x8x128xf32>,
    %c0_36 = arith.constant 0 : index
    %c0_37 = arith.constant 0 : index
    %c0_38 = arith.constant 0 : index
    %44 = vector.load %arg10[%c0_36, %c0_37, %c0_38] : memref<1x8x128xf32, #tpu.memory_space<vmem>>, vector<1x8x128xf32>
    %45 = vector.shape_cast %44 : vector<1x8x128xf32> to vector<8x128xf32>
    %46 = vector.shape_cast %34 : vector<8x128xf32> to vector<1x8x128xf32>
    tpu.vector_store %arg10[%c0_36, %c0_37, %c0_38], %46 {strides = array<i32>} : memref<1x8x128xf32, #tpu.memory_space<vmem>>, vector<1x8x128xf32>,
    %c0_39 = arith.constant 0 : index
    %c0_40 = arith.constant 0 : index
    %c0_41 = arith.constant 0 : index
    %47 = vector.load %arg11[%c0_39, %c0_40, %c0_41] : memref<1x8x128xf32, #tpu.memory_space<vmem>>, vector<1x8x128xf32>
    %48 = vector.shape_cast %47 : vector<1x8x128xf32> to vector<8x128xf32>
    %49 = vector.shape_cast %30 : vector<8x128xf32> to vector<1x8x128xf32>
    tpu.vector_store %arg11[%c0_39, %c0_40, %c0_41], %49 {strides = array<i32>} : memref<1x8x128xf32, #tpu.memory_space<vmem>>, vector<1x8x128xf32>,
    return
  }
  func.func @transform_0(%arg0: i32) -> (i32, i32, i32) {
    %c0_i32 = arith.constant 0 : i32
    %c0_i32_0 = arith.constant 0 : i32
    %c0_i32_1 = arith.constant 0 : i32
    return %arg0, %c0_i32, %c0_i32_0 : i32, i32, i32
  }
  func.func @transform_1(%arg0: i32) -> (i32, i32, i32) {
    %c0_i32 = arith.constant 0 : i32
    %c0_i32_0 = arith.constant 0 : i32
    %c0_i32_1 = arith.constant 0 : i32
    %c0_i32_2 = arith.constant 0 : i32
    return %c0_i32, %c0_i32_0, %c0_i32_1 : i32, i32, i32
  }
  func.func @transform_2(%arg0: i32) -> (i32, i32) {
    %c0_i32 = arith.constant 0 : i32
    %c0_i32_0 = arith.constant 0 : i32
    %c0_i32_1 = arith.constant 0 : i32
    return %c0_i32, %c0_i32_0 : i32, i32
  }
  func.func @transform_3(%arg0: i32) -> (i32, i32) {
    %c0_i32 = arith.constant 0 : i32
    %c0_i32_0 = arith.constant 0 : i32
    %c0_i32_1 = arith.constant 0 : i32
    return %c0_i32, %c0_i32_0 : i32, i32
  }
  func.func @transform_4(%arg0: i32) -> (i32, i32) {
    %c0_i32 = arith.constant 0 : i32
    %c0_i32_0 = arith.constant 0 : i32
    %c0_i32_1 = arith.constant 0 : i32
    return %c0_i32, %c0_i32_0 : i32, i32
  }
  func.func @transform_5(%arg0: i32) -> (i32, i32, i32) {
    %c0_i32 = arith.constant 0 : i32
    %c0_i32_0 = arith.constant 0 : i32
    %c0_i32_1 = arith.constant 0 : i32
    %c0_i32_2 = arith.constant 0 : i32
    return %c0_i32, %c0_i32_0, %c0_i32_1 : i32, i32, i32
  }
  func.func @transform_6(%arg0: i32) -> (i32, i32, i32) {
    %c0_i32 = arith.constant 0 : i32
    %c0_i32_0 = arith.constant 0 : i32
    %c0_i32_1 = arith.constant 0 : i32
    %c0_i32_2 = arith.constant 0 : i32
    return %c0_i32, %c0_i32_0, %c0_i32_1 : i32, i32, i32
  }
  func.func @transform_7(%arg0: i32) -> (i32, i32) {
    %c0_i32 = arith.constant 0 : i32
    %c0_i32_0 = arith.constant 0 : i32
    %c0_i32_1 = arith.constant 0 : i32
    return %c0_i32, %c0_i32_0 : i32, i32
  }
  func.func @transform_8(%arg0: i32) -> (i32, i32) {
    %c0_i32 = arith.constant 0 : i32
    %c0_i32_0 = arith.constant 0 : i32
    %c0_i32_1 = arith.constant 0 : i32
    return %c0_i32, %c0_i32_0 : i32, i32
  }
  func.func @transform_9(%arg0: i32) -> (i32, i32, i32) {
    %c0_i32 = arith.constant 0 : i32
    %c0_i32_0 = arith.constant 0 : i32
    %c0_i32_1 = arith.constant 0 : i32
    return %arg0, %c0_i32, %c0_i32_0 : i32, i32, i32
  }
  func.func @transform_10(%arg0: i32) -> (i32, i32, i32) {
    %c0_i32 = arith.constant 0 : i32
    %c0_i32_0 = arith.constant 0 : i32
    %c0_i32_1 = arith.constant 0 : i32
    return %arg0, %c0_i32, %c0_i32_0 : i32, i32, i32
  }
}

</mosaic_0001>

<llo_original>
// kernel: prnn_forward_seq.1
$region0: #{prnn_forward_seq.1}
  #allocation0 [shape = 'u32[]', space=smem, size = 0x4, offset = 0x4, fixed_abs, tag = 'smem constant byte address 0x4 - core index']
  #allocation1 [shape = 'u32[72,128]{1,0:T(1,128)}', space=vmem, size = 0x9000, scoped, tag = 'internal scratch']
  #allocation2 [shape = 'f32[3,8,128]{2,1,0:T(8,128)}', space=vmem, size = 0x3000, scoped, tag = 'scratch operand']
  %s0 = inlined_call_operand.vmem [shape: f32[8,8,128], index: 0, kind: input, shape index: {}]
  %s1 = inlined_call_operand.vmem [shape: f32[3,8,128], index: 1, kind: input, shape index: {}]
  %s2 = inlined_call_operand.vmem [shape: f32[128,128], index: 2, kind: input, shape index: {}]
  %s3 = inlined_call_operand.vmem [shape: f32[128,128], index: 3, kind: input, shape index: {}]
  %s4 = inlined_call_operand.vmem [shape: f32[128,128], index: 4, kind: input, shape index: {}]
  %s5 = inlined_call_operand.vmem [shape: f32[3,128,128], index: 5, kind: input, shape index: {}]
  %s6 = inlined_call_operand.vmem [shape: f32[3,8,128], index: 6, kind: input, shape index: {}]
  %s7 = inlined_call_operand.vmem [shape: f32[128,128], index: 7, kind: input, shape index: {}]
  %s8 = inlined_call_operand.vmem [shape: f32[8,128], index: 8, kind: input, shape index: {}]
  %s9 = inlined_call_operand.hbm [shape: f32[8,8,128], index: 9, kind: output, shape index: {0}]
  %s10 = inlined_call_operand.hbm [shape: f32[8,8,128], index: 10, kind: output, shape index: {1}]
  %11 = xla_tuple %s9, %s10
  %s12 = sld [smem:[#allocation0]]
  $region81: #{prnn_forward_seq.1} parent=0
    _
  %s14 = ssub.s32 1, %s12
  %s15 = scalar_select 0, %s14, %s12
  $region1: #{prnn_forward_seq.1} parent=0
    #allocation3 [shape = 'u8[8192]{0}', space=vmem, size = 0x2000, scoped, tag = 'output window, operand 0']
    #allocation4 [shape = 's32[2]{0}', space=sflag, size = 0x8, scoped, tag = 'scoped memory for prnn_forward_seq.1']
    #allocation5 [shape = 'u8[8192]{0}', space=vmem, size = 0x2000, scoped, tag = 'output window, operand 1']
    #allocation6 [shape = 's32[2]{0}', space=sflag, size = 0x8, scoped, tag = 'scoped memory for prnn_forward_seq.1']
    %16 = vsyncpa [#allocation4], 0
    %s17 = scalar_lea.sflag [#allocation4], 1
    %18 = vsyncpa %s17, 0
    %19 = vsyncpa [#allocation6], 0
    %s20 = scalar_lea.sflag [#allocation6], 1
    %21 = vsyncpa %s20, 0
    loop: start=0, step=1, limit=10
    $region2: #{prnn_forward_seq.1} parent=1 // loop_pre_header
      _
    $region3: #{prnn_forward_seq.1} parent=1 // loop_header
      %s23 = sphi 0, %s27
      %p24 = scmp.ge.s32.totalorder %s23, 10
      %s33 = sphi 0, %s35
      %s36 = sphi 0, %s33
      %s37 = sphi 0, %s36
      %s53 = sphi 0, %s37
      %s57 = sphi 0, %s57
      %s59 = sphi 0, %s57
      %s60 = sphi 0, %s59
      %s74 = sphi 0, %s60
      %s78 = sphi 0, %s78
      %s80 = sphi 0, %s78
      %s81 = sphi 0, %s80
      %s95 = sphi 0, %s81
      %s99 = sphi 0, %s99
      %s101 = sphi 0, %s99
      %s102 = sphi 0, %s101
      %s116 = sphi 0, %s102
      %s120 = sphi 0, %s120
      %s122 = sphi 0, %s120
      %s123 = sphi 0, %s122
      %s137 = sphi 0, %s123
      %s141 = sphi 0, %s141
      %s143 = sphi 0, %s141
      %s144 = sphi 0, %s143
      %s158 = sphi 0, %s144
      %s162 = sphi 0, %s162
      %s164 = sphi 0, %s162
      %s165 = sphi 0, %s164
      %s179 = sphi 0, %s165
      %s183 = sphi 0, %s183
      %s185 = sphi 0, %s183
      %s186 = sphi 0, %s185
      %s200 = sphi 0, %s186
      %s204 = sphi 0, %s204
      %s206 = sphi 0, %s204
      %s207 = sphi 0, %s206
      %s221 = sphi 0, %s207
      %s227 = sphi 0, %s229
      %s230 = sphi 0, %s227
      %s231 = sphi 0, %s230
      %s247 = sphi 0, %s231
      %s253 = sphi 0, %s255
      %s256 = sphi 0, %s253
      %s257 = sphi 0, %s256
      %s273 = sphi 0, %s257
    $region4: #{prnn_forward_seq.1} parent=1 // loop_header_branch
      %26 = sbr.rel (%p24) target = $region8
    $region5: #{prnn_forward_seq.1} parent=1 // loop_body
      %s28 = ssub.s32 %s23, 1
      %s29 = ssub.s32 %s23, 2
      %s30 = sadd.s32 %s23, 1
      %s31 = ssub.s32 %s23, %s30
      %p32 = scmp.eq.s32.totalorder %s31, 0
      %s34 = sadd.s32 %s33, 1
      %s35 = scalar_select %p32, %s33, %s34
      %p38 = pneg %p32
      %p39 = scmp.eq.s32.totalorder %s23, 7
      %p40 = por %p38, %p39
      %p41 = scmp.ne.s32.totalorder %s33, %s36
      %p42 = scmp.eq.s32.totalorder %s23, 0
      %p43 = por %p41, %p42
      %p44 = scmp.ne.s32.totalorder %s33, %s36
      %p45 = scmp.eq.s32.totalorder %s28, 7
      %p46 = por %p44, %p45
      %p47 = scmp.ne.s32.totalorder %s36, %s37
      %p48 = scmp.eq.s32.totalorder %s28, 0
      %p49 = por %p47, %p48
      %p50 = scmp.ne.s32.totalorder %s36, %s37
      %p51 = scmp.eq.s32.totalorder %s29, 7
      %p52 = por %p50, %p51
      %p54 = scmp.ne.s32.totalorder %s37, %s53
      %p55 = scmp.eq.s32.totalorder %s29, 0
      %p56 = por %p54, %p55
      %s58 = sadd.s32 %s57, 1
      %p61 = scmp.eq.s32.totalorder %s23, 7
      %p62 = scmp.ne.s32.totalorder %s57, %s59
      %p63 = scmp.eq.s32.totalorder %s23, 0
      %p64 = por %p62, %p63
      %p65 = scmp.ne.s32.totalorder %s57, %s59
      %p66 = scmp.eq.s32.totalorder %s28, 7
      %p67 = por %p65, %p66
      %p68 = scmp.ne.s32.totalorder %s59, %s60
      %p69 = scmp.eq.s32.totalorder %s28, 0
      %p70 = por %p68, %p69
      %p71 = scmp.ne.s32.totalorder %s59, %s60
      %p72 = scmp.eq.s32.totalorder %s29, 7
      %p73 = por %p71, %p72
      %p75 = scmp.ne.s32.totalorder %s60, %s74
      %p76 = scmp.eq.s32.totalorder %s29, 0
      %p77 = por %p75, %p76
      %s79 = sadd.s32 %s78, 1
      %p82 = scmp.eq.s32.totalorder %s23, 7
      %p83 = scmp.ne.s32.totalorder %s78, %s80
      %p84 = scmp.eq.s32.totalorder %s23, 0
      %p85 = por %p83, %p84
      %p86 = scmp.ne.s32.totalorder %s78, %s80
      %p87 = scmp.eq.s32.totalorder %s28, 7
      %p88 = por %p86, %p87
      %p89 = scmp.ne.s32.totalorder %s80, %s81
      %p90 = scmp.eq.s32.totalorder %s28, 0
      %p91 = por %p89, %p90
      %p92 = scmp.ne.s32.totalorder %s80, %s81
      %p93 = scmp.eq.s32.totalorder %s29, 7
      %p94 = por %p92, %p93
      %p96 = scmp.ne.s32.totalorder %s81, %s95
      %p97 = scmp.eq.s32.totalorder %s29, 0
      %p98 = por %p96, %p97
      %s100 = sadd.s32 %s99, 1
      %p103 = scmp.eq.s32.totalorder %s23, 7
      %p104 = scmp.ne.s32.totalorder %s99, %s101
      %p105 = scmp.eq.s32.totalorder %s23, 0
      %p106 = por %p104, %p105
      %p107 = scmp.ne.s32.totalorder %s99, %s101
      %p108 = scmp.eq.s32.totalorder %s28, 7
      %p109 = por %p107, %p108
      %p110 = scmp.ne.s32.totalorder %s101, %s102
      %p111 = scmp.eq.s32.totalorder %s28, 0
      %p112 = por %p110, %p111
      %p113 = scmp.ne.s32.totalorder %s101, %s102
      %p114 = scmp.eq.s32.totalorder %s29, 7
      %p115 = por %p113, %p114
      %p117 = scmp.ne.s32.totalorder %s102, %s116
      %p118 = scmp.eq.s32.totalorder %s29, 0
      %p119 = por %p117, %p118
      %s121 = sadd.s32 %s120, 1
      %p124 = scmp.eq.s32.totalorder %s23, 7
      %p125 = scmp.ne.s32.totalorder %s120, %s122
      %p126 = scmp.eq.s32.totalorder %s23, 0
      %p127 = por %p125, %p126
      %p128 = scmp.ne.s32.totalorder %s120, %s122
      %p129 = scmp.eq.s32.totalorder %s28, 7
      %p130 = por %p128, %p129
      %p131 = scmp.ne.s32.totalorder %s122, %s123
      %p132 = scmp.eq.s32.totalorder %s28, 0
      %p133 = por %p131, %p132
      %p134 = scmp.ne.s32.totalorder %s122, %s123
      %p135 = scmp.eq.s32.totalorder %s29, 7
      %p136 = por %p134, %p135
      %p138 = scmp.ne.s32.totalorder %s123, %s137
      %p139 = scmp.eq.s32.totalorder %s29, 0
      %p140 = por %p138, %p139
      %s142 = sadd.s32 %s141, 1
      %p145 = scmp.eq.s32.totalorder %s23, 7
      %p146 = scmp.ne.s32.totalorder %s141, %s143
      %p147 = scmp.eq.s32.totalorder %s23, 0
      %p148 = por %p146, %p147
      %p149 = scmp.ne.s32.totalorder %s141, %s143
      %p150 = scmp.eq.s32.totalorder %s28, 7
      %p151 = por %p149, %p150
      %p152 = scmp.ne.s32.totalorder %s143, %s144
      %p153 = scmp.eq.s32.totalorder %s28, 0
      %p154 = por %p152, %p153
      %p155 = scmp.ne.s32.totalorder %s143, %s144
      %p156 = scmp.eq.s32.totalorder %s29, 7
      %p157 = por %p155, %p156
      %p159 = scmp.ne.s32.totalorder %s144, %s158
      %p160 = scmp.eq.s32.totalorder %s29, 0
      %p161 = por %p159, %p160
      %s163 = sadd.s32 %s162, 1
      %p166 = scmp.eq.s32.totalorder %s23, 7
      %p167 = scmp.ne.s32.totalorder %s162, %s164
      %p168 = scmp.eq.s32.totalorder %s23, 0
      %p169 = por %p167, %p168
      %p170 = scmp.ne.s32.totalorder %s162, %s164
      %p171 = scmp.eq.s32.totalorder %s28, 7
      %p172 = por %p170, %p171
      %p173 = scmp.ne.s32.totalorder %s164, %s165
      %p174 = scmp.eq.s32.totalorder %s28, 0
      %p175 = por %p173, %p174
      %p176 = scmp.ne.s32.totalorder %s164, %s165
      %p177 = scmp.eq.s32.totalorder %s29, 7
      %p178 = por %p176, %p177
      %p180 = scmp.ne.s32.totalorder %s165, %s179
      %p181 = scmp.eq.s32.totalorder %s29, 0
      %p182 = por %p180, %p181
      %s184 = sadd.s32 %s183, 1
      %p187 = scmp.eq.s32.totalorder %s23, 7
      %p188 = scmp.ne.s32.totalorder %s183, %s185
      %p189 = scmp.eq.s32.totalorder %s23, 0
      %p190 = por %p188, %p189
      %p191 = scmp.ne.s32.totalorder %s183, %s185
      %p192 = scmp.eq.s32.totalorder %s28, 7
      %p193 = por %p191, %p192
      %p194 = scmp.ne.s32.totalorder %s185, %s186
      %p195 = scmp.eq.s32.totalorder %s28, 0
      %p196 = por %p194, %p195
      %p197 = scmp.ne.s32.totalorder %s185, %s186
      %p198 = scmp.eq.s32.totalorder %s29, 7
      %p199 = por %p197, %p198
      %p201 = scmp.ne.s32.totalorder %s186, %s200
      %p202 = scmp.eq.s32.totalorder %s29, 0
      %p203 = por %p201, %p202
      %s205 = sadd.s32 %s204, 1
      %p208 = scmp.eq.s32.totalorder %s23, 7
      %p209 = scmp.ne.s32.totalorder %s204, %s206
      %p210 = scmp.eq.s32.totalorder %s23, 0
      %p211 = por %p209, %p210
      %p212 = scmp.ne.s32.totalorder %s204, %s206
      %p213 = scmp.eq.s32.totalorder %s28, 7
      %p214 = por %p212, %p213
      %p215 = scmp.ne.s32.totalorder %s206, %s207
      %p216 = scmp.eq.s32.totalorder %s28, 0
      %p217 = por %p215, %p216
      %p218 = scmp.ne.s32.totalorder %s206, %s207
      %p219 = scmp.eq.s32.totalorder %s29, 7
      %p220 = por %p218, %p219
      %p222 = scmp.ne.s32.totalorder %s207, %s221
      %p223 = scmp.eq.s32.totalorder %s29, 0
      %p224 = por %p222, %p223
      %s225 = ssub.s32 %s23, %s30
      %p226 = scmp.eq.s32.totalorder %s225, 0
      %s228 = sadd.s32 %s227, 1
      %s229 = scalar_select %p226, %s227, %s228
      %p232 = pneg %p226
      %p233 = scmp.eq.s32.totalorder %s23, 7
      %p234 = por %p232, %p233
      %p235 = scmp.ne.s32.totalorder %s227, %s230
      %p236 = scmp.eq.s32.totalorder %s23, 0
      %p237 = por %p235, %p236
      %p238 = scmp.ne.s32.totalorder %s227, %s230
      %p239 = scmp.eq.s32.totalorder %s28, 7
      %p240 = por %p238, %p239
      %p241 = scmp.ne.s32.totalorder %s230, %s231
      %p242 = scmp.eq.s32.totalorder %s28, 0
      %p243 = por %p241, %p242
      %p244 = scmp.ne.s32.totalorder %s230, %s231
      %p245 = scmp.eq.s32.totalorder %s29, 7
      %p246 = por %p244, %p245
      %p248 = scmp.ne.s32.totalorder %s231, %s247
      %p249 = scmp.eq.s32.totalorder %s29, 0
      %p250 = por %p248, %p249
      %s251 = ssub.s32 %s23, %s30
      %p252 = scmp.eq.s32.totalorder %s251, 0
      %s254 = sadd.s32 %s253, 1
      %s255 = scalar_select %p252, %s253, %s254
      %p258 = pneg %p252
      %p259 = scmp.eq.s32.totalorder %s23, 7
      %p260 = por %p258, %p259
      %p261 = scmp.ne.s32.totalorder %s253, %s256
      %p262 = scmp.eq.s32.totalorder %s23, 0
      %p263 = por %p261, %p262
      %p264 = scmp.ne.s32.totalorder %s253, %s256
      %p265 = scmp.eq.s32.totalorder %s28, 7
      %p266 = por %p264, %p265
      %p267 = scmp.ne.s32.totalorder %s256, %s257
      %p268 = scmp.eq.s32.totalorder %s28, 0
      %p269 = por %p267, %p268
      %p270 = scmp.ne.s32.totalorder %s256, %s257
      %p271 = scmp.eq.s32.totalorder %s29, 7
      %p272 = por %p270, %p271
      %p274 = scmp.ne.s32.totalorder %s257, %s273
      %p275 = scmp.eq.s32.totalorder %s29, 0
      %p276 = por %p274, %p275
      %p277 = scmp.le.s32.totalorder 1, %s23
      %p278 = scmp.lt.s32.totalorder %s23, 9
      %p279 = pnand %p277, %p278
      %p280 = pneg %p279
      // Predicated region
      $region9: #{prnn_forward_seq.1} parent=5 // pred_check
        _
      $region10: #{prnn_forward_seq.1} parent=5 // pred_check_branch
        %282 = sbr.rel (%p279) target = $region12
      $region11: #{prnn_forward_seq.1} parent=5 // pred_region
        %s283 = ssub.s32 %s23, 1
        // Predicated region
        $region13: #{prnn_forward_seq.1} parent=11 // pred_check
          %p284 = pneg %p70
        $region14: #{prnn_forward_seq.1} parent=11 // pred_check_branch
          %286 = sbr.rel (%p284) target = $region16
        $region15: #{prnn_forward_seq.1} parent=11 // pred_region
          _
        $region16: #{prnn_forward_seq.1} parent=11 // pred_fallthru
          _
        // Predicated region
        $region17: #{prnn_forward_seq.1} parent=11 // pred_check
          %p287 = pneg %p91
        $region18: #{prnn_forward_seq.1} parent=11 // pred_check_branch
          %289 = sbr.rel (%p287) target = $region20
        $region19: #{prnn_forward_seq.1} parent=11 // pred_region
          _
        $region20: #{prnn_forward_seq.1} parent=11 // pred_fallthru
          _
        // Predicated region
        $region21: #{prnn_forward_seq.1} parent=11 // pred_check
          %p290 = pneg %p112
        $region22: #{prnn_forward_seq.1} parent=11 // pred_check_branch
          %292 = sbr.rel (%p290) target = $region24
        $region23: #{prnn_forward_seq.1} parent=11 // pred_region
          _
        $region24: #{prnn_forward_seq.1} parent=11 // pred_fallthru
          _
        // Predicated region
        $region25: #{prnn_forward_seq.1} parent=11 // pred_check
          %p293 = pneg %p133
        $region26: #{prnn_forward_seq.1} parent=11 // pred_check_branch
          %295 = sbr.rel (%p293) target = $region28
        $region27: #{prnn_forward_seq.1} parent=11 // pred_region
          _
        $region28: #{prnn_forward_seq.1} parent=11 // pred_fallthru
          _
        // Predicated region
        $region29: #{prnn_forward_seq.1} parent=11 // pred_check
          %p296 = pneg %p154
        $region30: #{prnn_forward_seq.1} parent=11 // pred_check_branch
          %298 = sbr.rel (%p296) target = $region32
        $region31: #{prnn_forward_seq.1} parent=11 // pred_region
          _
        $region32: #{prnn_forward_seq.1} parent=11 // pred_fallthru
          _
        // Predicated region
        $region33: #{prnn_forward_seq.1} parent=11 // pred_check
          %p299 = pneg %p175
        $region34: #{prnn_forward_seq.1} parent=11 // pred_check_branch
          %301 = sbr.rel (%p299) target = $region36
        $region35: #{prnn_forward_seq.1} parent=11 // pred_region
          _
        $region36: #{prnn_forward_seq.1} parent=11 // pred_fallthru
          _
        // Predicated region
        $region37: #{prnn_forward_seq.1} parent=11 // pred_check
          %p302 = pneg %p196
        $region38: #{prnn_forward_seq.1} parent=11 // pred_check_branch
          %304 = sbr.rel (%p302) target = $region40
        $region39: #{prnn_forward_seq.1} parent=11 // pred_region
          _
        $region40: #{prnn_forward_seq.1} parent=11 // pred_fallthru
          _
        // Predicated region
        $region41: #{prnn_forward_seq.1} parent=11 // pred_check
          %p305 = pneg %p217
        $region42: #{prnn_forward_seq.1} parent=11 // pred_check_branch
          %307 = sbr.rel (%p305) target = $region44
        $region43: #{prnn_forward_seq.1} parent=11 // pred_region
          _
        $region44: #{prnn_forward_seq.1} parent=11 // pred_fallthru
          _
      $region12: #{prnn_forward_seq.1} parent=5 // pred_fallthru
        _
      %p308 = scmp.lt.s32.totalorder %s23, 8
      // Predicated region
      $region45: #{prnn_forward_seq.1} parent=5 // pred_check
        %p309 = pneg %p308
      $region46: #{prnn_forward_seq.1} parent=5 // pred_check_branch
        %311 = sbr.rel (%p309) target = $region48
      $region47: #{prnn_forward_seq.1} parent=5 // pred_region
        // Predicated region
        $region49: #{prnn_forward_seq.1} parent=47 // pred_check
          %p312 = pneg %p43
        $region50: #{prnn_forward_seq.1} parent=47 // pred_check_branch
          %314 = sbr.rel (%p312) target = $region52
        $region51: #{prnn_forward_seq.1} parent=47 // pred_region
          %p315 = scmp.lt.s32.totalorder %s23, 7
          %s316 = scalar_select %p315, %s23, 7
          %s317 = smul.addr %s316, 8
          %s318 = scalar_lea.vmem %s0, %s317
        $region52: #{prnn_forward_seq.1} parent=47 // pred_fallthru
          _
      $region48: #{prnn_forward_seq.1} parent=5 // pred_fallthru
        _
      %p319 = scmp.le.s32.totalorder 1, %s23
      %p320 = scmp.lt.s32.totalorder %s23, 9
      %p321 = pnand %p319, %p320
      %p322 = pneg %p321
      // Predicated region
      $region53: #{prnn_forward_seq.1} parent=5 // pred_check
        _
      $region54: #{prnn_forward_seq.1} parent=5 // pred_check_branch
        %324 = sbr.rel (%p321) target = $region56
      $region55: #{prnn_forward_seq.1} parent=5 // pred_region
        %s325 = ssub.s32 %s23, 1
        %p326 = scmp.lt.s32.totalorder %s28, 7
        %s327 = scalar_select %p326, %s28, 7
        %s328 = smul.addr %s327, 8
        %s329 = scalar_lea.vmem %s0, %s328
        %p330 = pneg %p49
        %p331 = pneg %p46
        %p332 = pneg %p70
        %p333 = pneg %p67
        %p334 = pneg %p91
        %p335 = pneg %p88
        %p336 = pneg %p112
        %p337 = pneg %p109
        %p338 = pneg %p133
        %p339 = pneg %p130
        %p340 = pneg %p154
        %p341 = pneg %p151
        %p342 = pneg %p175
        %p343 = pneg %p172
        %p344 = pneg %p196
        %p345 = pneg %p193
        %p346 = pneg %p217
        %p347 = pneg %p214
        %p348 = pneg %p243
        %p349 = pneg %p240
        %s350 = sand.u32 %s230, 1
        %s351 = scalar_lea.sflag [#allocation4], %s350
        %s352 = sand.u32 %s230, 1
        %s353 = smul.addr %s352, 8
        %s354 = scalar_lea.vmem [#allocation3], %s353
        %p355 = pneg %p269
        %p356 = pneg %p266
        %s357 = sand.u32 %s256, 1
        %s358 = scalar_lea.sflag [#allocation6], %s357
        %s359 = sand.u32 %s256, 1
        %s360 = smul.addr %s359, 8
        %s361 = scalar_lea.vmem [#allocation5], %s360
        %p362 = scmp.lt.s32.totalorder %s28, 7
        %s363 = scalar_select %p362, %s28, 7
        %s364 = smul.addr %s363, 8
        %s365 = scalar_lea.vmem %s0, %s364
        %p366 = scmp.eq.s32.totalorder %s28, 0
        // Predicated region
        $region57: #{prnn_forward_seq.1} parent=55 // pred_check
          %p367 = pneg %p366
        $region58: #{prnn_forward_seq.1} parent=55 // pred_check_branch
          %369 = sbr.rel (%p367) target = $region60
        $region59: #{prnn_forward_seq.1} parent=55 // pred_region
          %v370 = vld [vmem:[%s1] sm:$0xff]
          %v371 = vld [vmem:[%s1 + $0x8] sm:$0xff]
          %v372 = vld [vmem:[%s1 + $0x10] sm:$0xff]
          %373 = vst [vmem:[#allocation2] sm:$0xff] %v370
          %374 = vst [vmem:[#allocation2 + $0x8] sm:$0xff] %v371
          %375 = vst [vmem:[#allocation2 + $0x10] sm:$0xff] %v372
        $region60: #{prnn_forward_seq.1} parent=55 // pred_fallthru
          _
        %v376 = vld [vmem:[#allocation2] sm:$0xff]
        %v377 = vld [vmem:[#allocation2 + $0x8] sm:$0xff]
        %v378 = vld [vmem:[#allocation2 + $0x10] sm:$0xff]
        %v379 = vld [vmem:[%s5] sm:$0xff]
        %v380 = vld [vmem:[%s5 + $0x8] sm:$0xff]
        %v381 = vld [vmem:[%s5 + $0x10] sm:$0xff]
        %v382 = vld [vmem:[%s5 + $0x18] sm:$0xff]
        %v383 = vld [vmem:[%s5 + $0x20] sm:$0xff]
        %v384 = vld [vmem:[%s5 + $0x28] sm:$0xff]
        %v385 = vld [vmem:[%s5 + $0x30] sm:$0xff]
        %v386 = vld [vmem:[%s5 + $0x38] sm:$0xff]
        %v387 = vld [vmem:[%s5 + $0x40] sm:$0xff]
        %v388 = vld [vmem:[%s5 + $0x48] sm:$0xff]
        %v389 = vld [vmem:[%s5 + $0x50] sm:$0xff]
        %v390 = vld [vmem:[%s5 + $0x58] sm:$0xff]
        %v391 = vld [vmem:[%s5 + $0x60] sm:$0xff]
        %v392 = vld [vmem:[%s5 + $0x68] sm:$0xff]
        %v393 = vld [vmem:[%s5 + $0x70] sm:$0xff]
        %v394 = vld [vmem:[%s5 + $0x78] sm:$0xff]
        %v395 = vld [vmem:[%s5 + $0x80] sm:$0xff]
        %v396 = vld [vmem:[%s5 + $0x88] sm:$0xff]
        %v397 = vld [vmem:[%s5 + $0x90] sm:$0xff]
        %v398 = vld [vmem:[%s5 + $0x98] sm:$0xff]
        %v399 = vld [vmem:[%s5 + $0xa0] sm:$0xff]
        %v400 = vld [vmem:[%s5 + $0xa8] sm:$0xff]
        %v401 = vld [vmem:[%s5 + $0xb0] sm:$0xff]
        %v402 = vld [vmem:[%s5 + $0xb8] sm:$0xff]
        %v403 = vld [vmem:[%s5 + $0xc0] sm:$0xff]
        %v404 = vld [vmem:[%s5 + $0xc8] sm:$0xff]
        %v405 = vld [vmem:[%s5 + $0xd0] sm:$0xff]
        %v406 = vld [vmem:[%s5 + $0xd8] sm:$0xff]
        %v407 = vld [vmem:[%s5 + $0xe0] sm:$0xff]
        %v408 = vld [vmem:[%s5 + $0xe8] sm:$0xff]
        %v409 = vld [vmem:[%s5 + $0xf0] sm:$0xff]
        %v410 = vld [vmem:[%s5 + $0xf8] sm:$0xff]
        %v411 = vld [vmem:[%s5 + $0x100] sm:$0xff]
        %v412 = vld [vmem:[%s5 + $0x108] sm:$0xff]
        %v413 = vld [vmem:[%s5 + $0x110] sm:$0xff]
        %v414 = vld [vmem:[%s5 + $0x118] sm:$0xff]
        %v415 = vld [vmem:[%s5 + $0x120] sm:$0xff]
        %v416 = vld [vmem:[%s5 + $0x128] sm:$0xff]
        %v417 = vld [vmem:[%s5 + $0x130] sm:$0xff]
        %v418 = vld [vmem:[%s5 + $0x138] sm:$0xff]
        %v419 = vld [vmem:[%s5 + $0x140] sm:$0xff]
        %v420 = vld [vmem:[%s5 + $0x148] sm:$0xff]
        %v421 = vld [vmem:[%s5 + $0x150] sm:$0xff]
        %v422 = vld [vmem:[%s5 + $0x158] sm:$0xff]
        %v423 = vld [vmem:[%s5 + $0x160] sm:$0xff]
        %v424 = vld [vmem:[%s5 + $0x168] sm:$0xff]
        %v425 = vld [vmem:[%s5 + $0x170] sm:$0xff]
        %v426 = vld [vmem:[%s5 + $0x178] sm:$0xff]
        %v427 = vld [vmem:[%s6] sm:$0xff]
        %v428 = vld [vmem:[%s6 + $0x8] sm:$0xff]
        %v429 = vld [vmem:[%s6 + $0x10] sm:$0xff]
        %430 = vmatpush.msra.mxu0 %v394
        %431 = vmatpush.msra.mxu0 %v393
        %432 = vmatpush.msra.mxu0 %v392
        %433 = vmatpush.msra.mxu0 %v391
        %434 = vmatpush.msra.mxu0 %v390
        %435 = vmatpush.msra.mxu0 %v389
        %436 = vmatpush.msra.mxu0 %v388
        %437 = vmatpush.msra.mxu0 %v387
        %438 = vmatpush.msra.mxu0 %v386
        %439 = vmatpush.msra.mxu0 %v385
        %440 = vmatpush.msra.mxu0 %v384
        %441 = vmatpush.msra.mxu0 %v383
        %442 = vmatpush.msra.mxu0 %v382
        %443 = vmatpush.msra.mxu0 %v381
        %444 = vmatpush.msra.mxu0 %v380
        %445 = vmatpush.msra.mxu0 %v379
        %446 = vmatmul.f32.gmra.mxu0 %v376
        %v447 = vpop.f32.mrf.mxu0
        %v448 = vadd.f32 %v427, %v447
        %449 = vdwg.mxu0
        %450 = vmatpush.msra.mxu0 %v410
        %451 = vmatpush.msra.mxu0 %v409
        %452 = vmatpush.msra.mxu0 %v408
        %453 = vmatpush.msra.mxu0 %v407
        %454 = vmatpush.msra.mxu0 %v406
        %455 = vmatpush.msra.mxu0 %v405
        %456 = vmatpush.msra.mxu0 %v404
        %457 = vmatpush.msra.mxu0 %v403
        %458 = vmatpush.msra.mxu0 %v402
        %459 = vmatpush.msra.mxu0 %v401
        %460 = vmatpush.msra.mxu0 %v400
        %461 = vmatpush.msra.mxu0 %v399
        %462 = vmatpush.msra.mxu0 %v398
        %463 = vmatpush.msra.mxu0 %v397
        %464 = vmatpush.msra.mxu0 %v396
        %465 = vmatpush.msra.mxu0 %v395
        %466 = vmatmul.f32.gmra.mxu0 %v377
        %v467 = vpop.f32.mrf.mxu0
        %v468 = vadd.f32 %v428, %v467
        %469 = vdwg.mxu0
        %470 = vmatpush.msra.mxu0 %v426
        %471 = vmatpush.msra.mxu0 %v425
        %472 = vmatpush.msra.mxu0 %v424
        %473 = vmatpush.msra.mxu0 %v423
        %474 = vmatpush.msra.mxu0 %v422
        %475 = vmatpush.msra.mxu0 %v421
        %476 = vmatpush.msra.mxu0 %v420
        %477 = vmatpush.msra.mxu0 %v419
        %478 = vmatpush.msra.mxu0 %v418
        %479 = vmatpush.msra.mxu0 %v417
        %480 = vmatpush.msra.mxu0 %v416
        %481 = vmatpush.msra.mxu0 %v415
        %482 = vmatpush.msra.mxu0 %v414
        %483 = vmatpush.msra.mxu0 %v413
        %484 = vmatpush.msra.mxu0 %v412
        %485 = vmatpush.msra.mxu0 %v411
        %486 = vmatmul.f32.gmra.mxu0 %v378
        %v487 = vpop.f32.mrf.mxu0
        %v488 = vadd.f32 %v429, %v487
        %489 = vdwg.mxu0
        %v490 = vld [vmem:[%s365] sm:$0xff]
        %v491 = vld [vmem:[%s2] sm:$0xff]
        %v492 = vld [vmem:[%s2 + $0x8] sm:$0xff]
        %v493 = vld [vmem:[%s2 + $0x10] sm:$0xff]
        %v494 = vld [vmem:[%s2 + $0x18] sm:$0xff]
        %v495 = vld [vmem:[%s2 + $0x20] sm:$0xff]
        %v496 = vld [vmem:[%s2 + $0x28] sm:$0xff]
        %v497 = vld [vmem:[%s2 + $0x30] sm:$0xff]
        %v498 = vld [vmem:[%s2 + $0x38] sm:$0xff]
        %v499 = vld [vmem:[%s2 + $0x40] sm:$0xff]
        %v500 = vld [vmem:[%s2 + $0x48] sm:$0xff]
        %v501 = vld [vmem:[%s2 + $0x50] sm:$0xff]
        %v502 = vld [vmem:[%s2 + $0x58] sm:$0xff]
        %v503 = vld [vmem:[%s2 + $0x60] sm:$0xff]
        %v504 = vld [vmem:[%s2 + $0x68] sm:$0xff]
        %v505 = vld [vmem:[%s2 + $0x70] sm:$0xff]
        %v506 = vld [vmem:[%s2 + $0x78] sm:$0xff]
        %507 = vmatpush.msra.mxu0 %v506
        %508 = vmatpush.msra.mxu0 %v505
        %509 = vmatpush.msra.mxu0 %v504
        %510 = vmatpush.msra.mxu0 %v503
        %511 = vmatpush.msra.mxu0 %v502
        %512 = vmatpush.msra.mxu0 %v501
        %513 = vmatpush.msra.mxu0 %v500
        %514 = vmatpush.msra.mxu0 %v499
        %515 = vmatpush.msra.mxu0 %v498
        %516 = vmatpush.msra.mxu0 %v497
        %517 = vmatpush.msra.mxu0 %v496
        %518 = vmatpush.msra.mxu0 %v495
        %519 = vmatpush.msra.mxu0 %v494
        %520 = vmatpush.msra.mxu0 %v493
        %521 = vmatpush.msra.mxu0 %v492
        %522 = vmatpush.msra.mxu0 %v491
        %523 = vmatmul.f32.gmra.mxu0 %v490
        %v524 = vpop.f32.mrf.mxu0
        %v525 = vadd.f32 %v448, %v524
        %526 = vdwg.mxu0
        %v527 = vmax.f32 %v525, 0.0
        %v528 = vld [vmem:[%s3] sm:$0xff]
        %v529 = vld [vmem:[%s3 + $0x8] sm:$0xff]
        %v530 = vld [vmem:[%s3 + $0x10] sm:$0xff]
        %v531 = vld [vmem:[%s3 + $0x18] sm:$0xff]
        %v532 = vld [vmem:[%s3 + $0x20] sm:$0xff]
        %v533 = vld [vmem:[%s3 + $0x28] sm:$0xff]
        %v534 = vld [vmem:[%s3 + $0x30] sm:$0xff]
        %v535 = vld [vmem:[%s3 + $0x38] sm:$0xff]
        %v536 = vld [vmem:[%s3 + $0x40] sm:$0xff]
        %v537 = vld [vmem:[%s3 + $0x48] sm:$0xff]
        %v538 = vld [vmem:[%s3 + $0x50] sm:$0xff]
        %v539 = vld [vmem:[%s3 + $0x58] sm:$0xff]
        %v540 = vld [vmem:[%s3 + $0x60] sm:$0xff]
        %v541 = vld [vmem:[%s3 + $0x68] sm:$0xff]
        %v542 = vld [vmem:[%s3 + $0x70] sm:$0xff]
        %v543 = vld [vmem:[%s3 + $0x78] sm:$0xff]
        %544 = vmatpush.msra.mxu0 %v543
        %545 = vmatpush.msra.mxu0 %v542
        %546 = vmatpush.msra.mxu0 %v541
        %547 = vmatpush.msra.mxu0 %v540
        %548 = vmatpush.msra.mxu0 %v539
        %549 = vmatpush.msra.mxu0 %v538
        %550 = vmatpush.msra.mxu0 %v537
        %551 = vmatpush.msra.mxu0 %v536
        %552 = vmatpush.msra.mxu0 %v535
        %553 = vmatpush.msra.mxu0 %v534
        %554 = vmatpush.msra.mxu0 %v533
        %555 = vmatpush.msra.mxu0 %v532
        %556 = vmatpush.msra.mxu0 %v531
        %557 = vmatpush.msra.mxu0 %v530
        %558 = vmatpush.msra.mxu0 %v529
        %559 = vmatpush.msra.mxu0 %v528
        %560 = vmatmul.f32.gmra.mxu0 %v527
        %v561 = vpop.f32.mrf.mxu0
        %v562 = vadd.f32 %v468, %v561
        %563 = vdwg.mxu0
        %v564 = vmax.f32 %v562, 0.0
        %v565 = vld [vmem:[%s4] sm:$0xff]
        %v566 = vld [vmem:[%s4 + $0x8] sm:$0xff]
        %v567 = vld [vmem:[%s4 + $0x10] sm:$0xff]
        %v568 = vld [vmem:[%s4 + $0x18] sm:$0xff]
        %v569 = vld [vmem:[%s4 + $0x20] sm:$0xff]
        %v570 = vld [vmem:[%s4 + $0x28] sm:$0xff]
        %v571 = vld [vmem:[%s4 + $0x30] sm:$0xff]
        %v572 = vld [vmem:[%s4 + $0x38] sm:$0xff]
        %v573 = vld [vmem:[%s4 + $0x40] sm:$0xff]
        %v574 = vld [vmem:[%s4 + $0x48] sm:$0xff]
        %v575 = vld [vmem:[%s4 + $0x50] sm:$0xff]
        %v576 = vld [vmem:[%s4 + $0x58] sm:$0xff]
        %v577 = vld [vmem:[%s4 + $0x60] sm:$0xff]
        %v578 = vld [vmem:[%s4 + $0x68] sm:$0xff]
        %v579 = vld [vmem:[%s4 + $0x70] sm:$0xff]
        %v580 = vld [vmem:[%s4 + $0x78] sm:$0xff]
        %581 = vmatpush.msra.mxu0 %v580
        %582 = vmatpush.msra.mxu0 %v579
        %583 = vmatpush.msra.mxu0 %v578
        %584 = vmatpush.msra.mxu0 %v577
        %585 = vmatpush.msra.mxu0 %v576
        %586 = vmatpush.msra.mxu0 %v575
        %587 = vmatpush.msra.mxu0 %v574
        %588 = vmatpush.msra.mxu0 %v573
        %589 = vmatpush.msra.mxu0 %v572
        %590 = vmatpush.msra.mxu0 %v571
        %591 = vmatpush.msra.mxu0 %v570
        %592 = vmatpush.msra.mxu0 %v569
        %593 = vmatpush.msra.mxu0 %v568
        %594 = vmatpush.msra.mxu0 %v567
        %595 = vmatpush.msra.mxu0 %v566
        %596 = vmatpush.msra.mxu0 %v565
        %597 = vmatmul.f32.gmra.mxu0 %v564
        %v598 = vpop.f32.mrf.mxu0
        %v599 = vadd.f32 %v488, %v598
        %600 = vdwg.mxu0
        %v601 = vmax.f32 %v599, 0.0
        %v602 = vld [vmem:[%s7] sm:$0xff]
        %v603 = vld [vmem:[%s7 + $0x8] sm:$0xff]
        %v604 = vld [vmem:[%s7 + $0x10] sm:$0xff]
        %v605 = vld [vmem:[%s7 + $0x18] sm:$0xff]
        %v606 = vld [vmem:[%s7 + $0x20] sm:$0xff]
        %v607 = vld [vmem:[%s7 + $0x28] sm:$0xff]
        %v608 = vld [vmem:[%s7 + $0x30] sm:$0xff]
        %v609 = vld [vmem:[%s7 + $0x38] sm:$0xff]
        %v610 = vld [vmem:[%s7 + $0x40] sm:$0xff]
        %v611 = vld [vmem:[%s7 + $0x48] sm:$0xff]
        %v612 = vld [vmem:[%s7 + $0x50] sm:$0xff]
        %v613 = vld [vmem:[%s7 + $0x58] sm:$0xff]
        %v614 = vld [vmem:[%s7 + $0x60] sm:$0xff]
        %v615 = vld [vmem:[%s7 + $0x68] sm:$0xff]
        %v616 = vld [vmem:[%s7 + $0x70] sm:$0xff]
        %v617 = vld [vmem:[%s7 + $0x78] sm:$0xff]
        %v618 = vld [vmem:[%s8] sm:$0xff]
        %619 = vmatpush.msra.mxu0 %v617
        %620 = vmatpush.msra.mxu0 %v616
        %621 = vmatpush.msra.mxu0 %v615
        %622 = vmatpush.msra.mxu0 %v614
        %623 = vmatpush.msra.mxu0 %v613
        %624 = vmatpush.msra.mxu0 %v612
        %625 = vmatpush.msra.mxu0 %v611
        %626 = vmatpush.msra.mxu0 %v610
        %627 = vmatpush.msra.mxu0 %v609
        %628 = vmatpush.msra.mxu0 %v608
        %629 = vmatpush.msra.mxu0 %v607
        %630 = vmatpush.msra.mxu0 %v606
        %631 = vmatpush.msra.mxu0 %v605
        %632 = vmatpush.msra.mxu0 %v604
        %633 = vmatpush.msra.mxu0 %v603
        %634 = vmatpush.msra.mxu0 %v602
        %635 = vmatmul.f32.gmra.mxu0 %v601
        %v636 = vpop.f32.mrf.mxu0
        %v637 = vadd.f32 %v618, %v636
        %638 = vdwg.mxu0
        %639 = vst [vmem:[#allocation2] sm:$0xff] %v527
        %s640 = scalar_lea.vmem [#allocation2], 8
        %641 = vst [vmem:[%s640] sm:$0xff] %v564
        %s642 = scalar_lea.vmem [#allocation2], 16
        %643 = vst [vmem:[%s642] sm:$0xff] %v601
        %644 = vst [vmem:[%s354] sm:$0xff] %v637
        %645 = vst [vmem:[%s361] sm:$0xff] %v601
        %s646 = sand.u32 %s230, 1
        %s647 = scalar_lea.sflag [#allocation4], %s646
        %s648 = sand.u32 %s230, 1
        %s649 = smul.addr %s648, 8
        %s650 = scalar_lea.vmem [#allocation3], %s649
        %s651 = sand.u32 %s256, 1
        %s652 = scalar_lea.sflag [#allocation6], %s651
        %s653 = sand.u32 %s256, 1
        %s654 = smul.addr %s653, 8
        %s655 = scalar_lea.vmem [#allocation5], %s654
        // Predicated region
        $region61: #{prnn_forward_seq.1} parent=55 // pred_check
          %p656 = pneg %p240
        $region62: #{prnn_forward_seq.1} parent=55 // pred_check_branch
          %658 = sbr.rel (%p656) target = $region64
        $region63: #{prnn_forward_seq.1} parent=55 // pred_region
          %660 = vsyncadd %s647, 0
          %s661 = smul.addr %s28, 8
          %s662 = scalar_lea.hbm %s9, %s661
          %s664 = sshll.u32 %s650, 4
          %s665 = int_to_ptr.vmem [resolvable:$true] %s664
          %s666 = sshll.u32 %s662, 4
          %s667 = int_to_ptr.hbm [resolvable:$true] %s666
          %669 = dma.vmem_to_hbm [thread:$0]  %s665, 128, %s667, %s647
        $region64: #{prnn_forward_seq.1} parent=55 // pred_fallthru
          _
        // Predicated region
        $region65: #{prnn_forward_seq.1} parent=55 // pred_check
          %p670 = pneg %p266
        $region66: #{prnn_forward_seq.1} parent=55 // pred_check_branch
          %672 = sbr.rel (%p670) target = $region68
        $region67: #{prnn_forward_seq.1} parent=55 // pred_region
          %674 = vsyncadd %s652, 0
          %s675 = smul.addr %s28, 8
          %s676 = scalar_lea.hbm %s10, %s675
          %s678 = sshll.u32 %s655, 4
          %s679 = int_to_ptr.vmem [resolvable:$true] %s678
          %s680 = sshll.u32 %s676, 4
          %s681 = int_to_ptr.hbm [resolvable:$true] %s680
          %683 = dma.vmem_to_hbm [thread:$0]  %s679, 128, %s681, %s652
        $region68: #{prnn_forward_seq.1} parent=55 // pred_fallthru
          _
      $region56: #{prnn_forward_seq.1} parent=5 // pred_fallthru
        _
      %p684 = scmp.le.s32.totalorder 2, %s23
      // Predicated region
      $region69: #{prnn_forward_seq.1} parent=5 // pred_check
        %p685 = pneg %p684
      $region70: #{prnn_forward_seq.1} parent=5 // pred_check_branch
        %687 = sbr.rel (%p685) target = $region72
      $region71: #{prnn_forward_seq.1} parent=5 // pred_region
        %s688 = ssub.s32 %s23, 2
        // Predicated region
        $region73: #{prnn_forward_seq.1} parent=71 // pred_check
          %p689 = pneg %p246
        $region74: #{prnn_forward_seq.1} parent=71 // pred_check_branch
          %691 = sbr.rel (%p689) target = $region76
        $region75: #{prnn_forward_seq.1} parent=71 // pred_region
          %s692 = sand.u32 %s231, 1
          %s693 = scalar_lea.sflag [#allocation4], %s692
          %s694 = sand.u32 %s231, 1
          %s695 = smul.addr %s694, 8
          %s696 = scalar_lea.vmem [#allocation3], %s695
          %698 = dma.done %s693, 128
        $region76: #{prnn_forward_seq.1} parent=71 // pred_fallthru
          _
        // Predicated region
        $region77: #{prnn_forward_seq.1} parent=71 // pred_check
          %p699 = pneg %p272
        $region78: #{prnn_forward_seq.1} parent=71 // pred_check_branch
          %701 = sbr.rel (%p699) target = $region80
        $region79: #{prnn_forward_seq.1} parent=71 // pred_region
          %s702 = sand.u32 %s257, 1
          %s703 = scalar_lea.sflag [#allocation6], %s702
          %s704 = sand.u32 %s257, 1
          %s705 = smul.addr %s704, 8
          %s706 = scalar_lea.vmem [#allocation5], %s705
          %708 = dma.done %s703, 128
        $region80: #{prnn_forward_seq.1} parent=71 // pred_fallthru
          _
      $region72: #{prnn_forward_seq.1} parent=5 // pred_fallthru
        _
    $region6: #{prnn_forward_seq.1} parent=1 // loop_footer
      %s27 = sadd.s32 1, %s23
    $region7: #{prnn_forward_seq.1} parent=1 // loop_footer_branch
      %22 = sbr.rel target = $region3
    $region8: #{prnn_forward_seq.1} parent=1 // loop_exit
      _
    %709 = vsyncpa [#allocation4], 1
    %s710 = scalar_lea.sflag [#allocation4], 1
    %711 = vsyncpa %s710, 1
    %712 = vsyncpa [#allocation6], 1
    %s713 = scalar_lea.sflag [#allocation6], 1
    %714 = vsyncpa %s713, 1

</llo_original>
